<compile_context>
chip_gen: v7x
topology: tpu7x:2x2x1
jax: 0.10.0
libtpu: 0.0.40
codegen_flags: <defaults>
</compile_context>

<pallas_src>
import functools

import jax
import jax.numpy as jnp
import numpy as np
from jax import lax
from jax.experimental import pallas as pl
from jax.experimental.pallas import tpu as pltpu  # noqa: F401  (kept for TODO)


def _round_up(x, m):
    return (x + m - 1) // m * m


def _tcn_kernel(x_ref, w_ref, b_ref, o_ref, *, kernel_size, dilation, pad,
                l_out, c_pad):
    """Single-invocation kernel: whole problem in VMEM, one MXU push.

    x_ref: (B, C_in, L)      native NCL activation slab
    w_ref: (H, K * C_pad)    im2col-flattened weights, channel dim zero-padded
                             to a multiple of 8 (sublane-aligned tap groups)
    b_ref: (H, 1)            bias (broadcasts along the lane axis)
    o_ref: (B, H, L_out)     output, already in NCL layout
    """
    b_sz, c_in, l_in = x_ref.shape
    l_pad = l_in + 2 * pad

    cols = []
    for b in range(b_sz):                      # B is tiny & static -> unrolled
        xb = x_ref[b]                                            # (C_in, L)

        # In-kernel zero padding (VMEM only, no extra HBM pass):
        #  * sequence axis (lanes): symmetric pad of `pad` zeros,
        #  * channel axis (sublanes): C_in -> C_pad so each im2col tap group
        #    below is an aligned block of full 8-row sublane groups.
        if pad > 0:
            zseq = jnp.zeros((c_in, pad), xb.dtype)
            xb = jnp.concatenate([zseq, xb, zseq], axis=1)       # (C_in, L+2p)
        if c_pad > c_in:
            zch = jnp.zeros((c_pad - c_in, l_pad), xb.dtype)
            xb = jnp.concatenate([xb, zch], axis=0)              # (C_pad, L+2p)

        # im2col: K dilated, shifted views stacked along the (aligned) channel
        # axis.  NOTE: for realistic L (>=128 lanes) replace these static lane
        # slices with pltpu.roll (XLU slot) + prefix slice to keep the VPU
        # free; at 20 lanes the whole row fits in one vreg so a static slice
        # is already a single lane shift.
        cols.append(jnp.concatenate(
            [xb[:, t * dilation:t * dilation + l_out]
             for t in range(kernel_size)],
            axis=0))                                           # (K*C_pad, L_out)

    # Fold the batch into the RHS lanes: ONE MXU push for the whole layer.
    x_col = jnp.concatenate(cols, axis=1)                      # (K*C_pad, B*L_out)
    acc = jnp.dot(w_ref[...], x_col,
                  preferred_element_type=jnp.float32)          # (H, B*L_out)
    acc = acc + b_ref[...]                                     # (H, 1) bcast
    acc = jnp.maximum(acc, 0.0)        # dropout (eval mode) = identity; ReLU
    for b in range(b_sz):
        o_ref[b] = acc[:, b * l_out:(b + 1) * l_out].astype(o_ref.dtype)


def tcn_layer(x_ncl, weight, bias, *, kernel_size, dilation):
    """x_ncl: (B, C_in, L) f32; weight: (H, C_in, K); bias: (H,).

    Returns (B, H, L_out) matching torch.nn.Conv1d(..., dilation=d,
    padding=(K-1)*d//2) followed by ReLU (dropout in eval mode).
    """
    b_sz, c_in, l_in = x_ncl.shape
    h = weight.shape[0]
    pad = (kernel_size - 1) * dilation // 2
    l_out = l_in + 2 * pad - dilation * (kernel_size - 1)
    c_pad = _round_up(c_in, 8)

    # Only the tiny parameter tensors are massaged host-side; the activation
    # goes in untouched (no transpose / pad -> no extra HBM relayout pass).
    #   w_flat[h, t*C_pad + c] = weight[h, c, t]   for c < C_in, else 0
    w_taps = jnp.transpose(weight, (0, 2, 1))                   # (H, K, C_in)
    w_taps = jnp.pad(w_taps, ((0, 0), (0, 0), (0, c_pad - c_in)))
    w_flat = w_taps.reshape(h, kernel_size * c_pad)             # (H, K*C_pad)
    bias2d = bias.reshape(h, 1)

    kernel = functools.partial(_tcn_kernel, kernel_size=kernel_size,
                               dilation=dilation, pad=pad, l_out=l_out,
                               c_pad=c_pad)

    flops = 2 * b_sz * l_out * kernel_size * c_in * h
    bytes_accessed = 4 * (int(x_ncl.size) + int(w_flat.size) + int(bias2d.size)
                          + b_sz * h * l_out)

    # No grid: single invocation, all operands as whole-array VMEM blocks
    # (removes the per-grid-step overhead that dominated the old grid=(B,)).
    # Re-introduce lane-blocked L / batch grid axes only once the problem is
    # MXU-scale (L >= 128).
    return pl.pallas_call(
        kernel,
        out_shape=jax.ShapeDtypeStruct((b_sz, h, l_out), x_ncl.dtype),
        cost_estimate=pl.CostEstimate(flops=flops, transcendentals=0,
                                      bytes_accessed=bytes_accessed),
    )(x_ncl, w_flat, bias2d)


def _reference(x_ncl, weight, bias, *, kernel_size, dilation):
    pad = (kernel_size - 1) * dilation // 2
    y = lax.conv_general_dilated(
        x_ncl, weight,
        window_strides=(1,),
        padding=[(pad, pad)],
        rhs_dilation=(dilation,),
        dimension_numbers=("NCH", "OIH", "NCH"),
    ) + bias[None, :, None]
    return jnp.maximum(y, 0.0)


if __name__ == "__main__":
    # module hyperparameters (input_size = num_features = 10)
    B = 2
    INPUT_SIZE = 10    # num_features
    HIDDEN_SIZE = 32
    KERNEL_SIZE = 3
    DILATION = 2
    L = 16

    key = jax.random.PRNGKey(0)
    kx, kw, kb = jax.random.split(key, 3)

    x = jax.random.normal(kx, (B, INPUT_SIZE, L), dtype=jnp.float32)
    # deterministic Conv1d parameter init (uniform, like torch's kaiming bound)
    bound = 1.0 / np.sqrt(INPUT_SIZE * KERNEL_SIZE)
    weight = jax.random.uniform(kw, (HIDDEN_SIZE, INPUT_SIZE, KERNEL_SIZE),
                                minval=-bound, maxval=bound, dtype=jnp.float32)
    bias = jax.random.uniform(kb, (HIDDEN_SIZE,),
                              minval=-bound, maxval=bound, dtype=jnp.float32)

    out = tcn_layer(x, weight, bias, kernel_size=KERNEL_SIZE, dilation=DILATION)
    out = jax.block_until_ready(out)

    ref = _reference(x, weight, bias, kernel_size=KERNEL_SIZE, dilation=DILATION)
    np.testing.assert_allclose(np.asarray(out), np.asarray(ref),
                               rtol=1e-5, atol=1e-5)

    # (K-1)*dilation is even here, so "same" length output.
    assert out.shape == (B, HIDDEN_SIZE, L)
    print("KERNEL_OK")
</pallas_src>

<mosaic_0001>
module attributes {stable_mosaic.version = 11 : i64} {
  func.func @_tcn_kernel(%arg0: memref<2x10x16xf32, #tpu.memory_space<vmem>>, %arg1: memref<32x48xf32, #tpu.memory_space<vmem>>, %arg2: memref<32x1xf32, #tpu.memory_space<vmem>>, %arg3: memref<2x32x16xf32, #tpu.memory_space<vmem>>) attributes {dimension_semantics = [], scalar_prefetch = 0 : i64, scratch_operands = 0 : i64, tpu.core_type = #tpu.core_type<tc>} {
    %c0 = arith.constant 0 : index
    %c0_0 = arith.constant 0 : index
    %c0_1 = arith.constant 0 : index
    %0 = vector.load %arg0[%c0, %c0_0, %c0_1] : memref<2x10x16xf32, #tpu.memory_space<vmem>>, vector<1x10x16xf32>
    %1 = vector.shape_cast %0 : vector<1x10x16xf32> to vector<10x16xf32>
    %cst = arith.constant 0.000000e+00 : f32
    %2 = vector.broadcast %cst : f32 to vector<10x2xf32>
    %3 = tpu.concatenate %2, %1, %2 in 1 : vector<10x2xf32>, vector<10x16xf32>, vector<10x2xf32> -> vector<10x20xf32>
    %cst_2 = arith.constant 0.000000e+00 : f32
    %4 = vector.broadcast %cst_2 : f32 to vector<6x20xf32>
    %5 = tpu.concatenate %3, %4 in 0 : vector<10x20xf32>, vector<6x20xf32> -> vector<16x20xf32>
    %6 = vector.extract_strided_slice %5 {offsets = [0, 0], sizes = [16, 16], strides = [1, 1]} : vector<16x20xf32> to vector<16x16xf32>
    %7 = vector.extract_strided_slice %5 {offsets = [0, 2], sizes = [16, 16], strides = [1, 1]} : vector<16x20xf32> to vector<16x16xf32>
    %8 = vector.extract_strided_slice %5 {offsets = [0, 4], sizes = [16, 16], strides = [1, 1]} : vector<16x20xf32> to vector<16x16xf32>
    %9 = tpu.concatenate %6, %7, %8 in 0 : vector<16x16xf32>, vector<16x16xf32>, vector<16x16xf32> -> vector<48x16xf32>
    %c1 = arith.constant 1 : index
    %c0_3 = arith.constant 0 : index
    %c0_4 = arith.constant 0 : index
    %10 = vector.load %arg0[%c1, %c0_3, %c0_4] : memref<2x10x16xf32, #tpu.memory_space<vmem>>, vector<1x10x16xf32>
    %11 = vector.shape_cast %10 : vector<1x10x16xf32> to vector<10x16xf32>
    %cst_5 = arith.constant 0.000000e+00 : f32
    %12 = vector.broadcast %cst_5 : f32 to vector<10x2xf32>
    %13 = tpu.concatenate %12, %11, %12 in 1 : vector<10x2xf32>, vector<10x16xf32>, vector<10x2xf32> -> vector<10x20xf32>
    %cst_6 = arith.constant 0.000000e+00 : f32
    %14 = vector.broadcast %cst_6 : f32 to vector<6x20xf32>
    %15 = tpu.concatenate %13, %14 in 0 : vector<10x20xf32>, vector<6x20xf32> -> vector<16x20xf32>
    %16 = vector.extract_strided_slice %15 {offsets = [0, 0], sizes = [16, 16], strides = [1, 1]} : vector<16x20xf32> to vector<16x16xf32>
    %17 = vector.extract_strided_slice %15 {offsets = [0, 2], sizes = [16, 16], strides = [1, 1]} : vector<16x20xf32> to vector<16x16xf32>
    %18 = vector.extract_strided_slice %15 {offsets = [0, 4], sizes = [16, 16], strides = [1, 1]} : vector<16x20xf32> to vector<16x16xf32>
    %19 = tpu.concatenate %16, %17, %18 in 0 : vector<16x16xf32>, vector<16x16xf32>, vector<16x16xf32> -> vector<48x16xf32>
    %20 = tpu.concatenate %9, %19 in 1 : vector<48x16xf32>, vector<48x16xf32> -> vector<48x32xf32>
    %c0_7 = arith.constant 0 : index
    %c0_8 = arith.constant 0 : index
    %21 = vector.load %arg1[%c0_7, %c0_8] : memref<32x48xf32, #tpu.memory_space<vmem>>, vector<32x48xf32>
    %cst_9 = arith.constant dense<0.000000e+00> : vector<32x32xf32>
    %22 = tpu.matmul %21, %20, %cst_9 {dimension_numbers = #tpu.dot_dimension_numbers<[1], [0], [0], [1], [0, 0, 1, 1], [], []>} : vector<32x48xf32>, vector<48x32xf32>, vector<32x32xf32> -> vector<32x32xf32>
    %c0_10 = arith.constant 0 : index
    %c0_11 = arith.constant 0 : index
    %23 = vector.load %arg2[%c0_10, %c0_11] : memref<32x1xf32, #tpu.memory_space<vmem>>, vector<32x1xf32>
    %24 = vector.broadcast %23 : vector<32x1xf32> to vector<32x32xf32>
    %25 = arith.addf %22, %24 : vector<32x32xf32>
    %cst_12 = arith.constant 0.000000e+00 : f32
    %26 = vector.broadcast %cst_12 : f32 to vector<32x32xf32>
    %27 = arith.maximumf %25, %26 : vector<32x32xf32>
    %28 = vector.extract_strided_slice %27 {offsets = [0, 0], sizes = [32, 16], strides = [1, 1]} : vector<32x32xf32> to vector<32x16xf32>
    %c0_13 = arith.constant 0 : index
    %c0_14 = arith.constant 0 : index
    %c0_15 = arith.constant 0 : index
    %29 = vector.load %arg3[%c0_13, %c0_14, %c0_15] : memref<2x32x16xf32, #tpu.memory_space<vmem>>, vector<1x32x16xf32>
    %30 = vector.shape_cast %29 : vector<1x32x16xf32> to vector<32x16xf32>
    %31 = vector.shape_cast %28 : vector<32x16xf32> to vector<1x32x16xf32>
    tpu.vector_store %arg3[%c0_13, %c0_14, %c0_15], %31 {strides = array<i32>} : memref<2x32x16xf32, #tpu.memory_space<vmem>>, vector<1x32x16xf32>,
    %32 = vector.extract_strided_slice %27 {offsets = [0, 16], sizes = [32, 16], strides = [1, 1]} : vector<32x32xf32> to vector<32x16xf32>
    %c1_16 = arith.constant 1 : index
    %c0_17 = arith.constant 0 : index
    %c0_18 = arith.constant 0 : index
    %33 = vector.load %arg3[%c1_16, %c0_17, %c0_18] : memref<2x32x16xf32, #tpu.memory_space<vmem>>, vector<1x32x16xf32>
    %34 = vector.shape_cast %33 : vector<1x32x16xf32> to vector<32x16xf32>
    %35 = vector.shape_cast %32 : vector<32x16xf32> to vector<1x32x16xf32>
    tpu.vector_store %arg3[%c1_16, %c0_17, %c0_18], %35 {strides = array<i32>} : memref<2x32x16xf32, #tpu.memory_space<vmem>>, vector<1x32x16xf32>,
    return
  }
}

</mosaic_0001>

<llo_original>
// kernel: tpu_custom_call.1
$region0: #{tpu_custom_call.1}
  #allocation0 [shape = 'u32[]', space=smem, size = 0x4, offset = 0x4, fixed_abs, tag = 'smem constant byte address 0x4 - core index']
  #allocation1 [shape = 'u32[144,128]{1,0:T(1,128)}', space=vmem, size = 0x12000, scoped, tag = 'internal scratch']
  %s0 = inlined_call_operand.vmem [shape: f32[2,10,16], index: 0, kind: input, shape index: {}]
  %s1 = inlined_call_operand.vmem [shape: f32[32,48], index: 1, kind: input, shape index: {}]
  %s2 = inlined_call_operand.vmem [shape: f32[32,1], index: 2, kind: input, shape index: {}]
  %s3 = inlined_call_operand.vmem [shape: f32[2,32,16], index: 3, kind: output, shape index: {}]
  %s4 = sld [smem:[#allocation0]]
  $region22: #{tpu_custom_call.1} parent=0
    _
  %s6 = ssub.s32 1, %s4
  %s7 = scalar_select 0, %s6, %s4
  // Predicated region
  $region2: #{tpu_custom_call.1} parent=0 // pred_check
    _
  $region3: #{tpu_custom_call.1} parent=0 // pred_check_branch
    %9 = sbr.rel (0) target = $region5
  $region4: #{tpu_custom_call.1} parent=0 // pred_region
    _
  $region5: #{tpu_custom_call.1} parent=0 // pred_fallthru
    _
  // Predicated region
  $region6: #{tpu_custom_call.1} parent=0 // pred_check
    _
  $region7: #{tpu_custom_call.1} parent=0 // pred_check_branch
    %11 = sbr.rel (0) target = $region9
  $region8: #{tpu_custom_call.1} parent=0 // pred_region
    _
  $region9: #{tpu_custom_call.1} parent=0 // pred_fallthru
    _
  // Predicated region
  $region10: #{tpu_custom_call.1} parent=0 // pred_check
    _
  $region11: #{tpu_custom_call.1} parent=0 // pred_check_branch
    %13 = sbr.rel (0) target = $region13
  $region12: #{tpu_custom_call.1} parent=0 // pred_region
    _
  $region13: #{tpu_custom_call.1} parent=0 // pred_fallthru
    _
  %v14 = vld [vmem:[%s0] sm:$0xff]
  %v15 = vld [vmem:[%s0 + $0x8] sm:$0x3]
  %18 = vrot.lane.b32.xlu0 %v14, 2
  %v19 = vpop.permute.xlu0 %18
  %20 = vrot.lane.b32.xlu0 %v15, 2
  %v21 = vpop.permute.xlu0 %20
  %vm24 = vcmask 15360
  %v25 = vsel %vm24, 0.0, %v19
  %v26 = vsel %vm24, 0.0, %v21
  %vm27 = vcmask 146432
  %v28 = vsel %vm27, %v25, 0.0
  %v29 = vsel %vm27, %v26, 0.0
  %vm30 = vcmask 1041408
  %v31 = vsel %vm30, %v29, 0.0
  %34 = vrot.lane.b32.xlu0 %v28, 126
  %v35 = vpop.permute.xlu0 %34
  %36 = vrot.lane.b32.xlu0 %v31, 126
  %v37 = vpop.permute.xlu0 %36
  %40 = vrot.lane.b32.xlu0 %v28, 124
  %v41 = vpop.permute.xlu0 %40
  %42 = vrot.lane.b32.xlu0 %v31, 124
  %v43 = vpop.permute.xlu0 %42
  %s46 = scalar_lea.vmem %s0, 16
  %v47 = vld [vmem:[%s46] sm:$0xff]
  %v48 = vld [vmem:[%s46 + $0x8] sm:$0x3]
  %51 = vrot.lane.b32.xlu0 %v47, 2
  %v52 = vpop.permute.xlu0 %51
  %53 = vrot.lane.b32.xlu0 %v48, 2
  %v54 = vpop.permute.xlu0 %53
  %v57 = vsel %vm24, 0.0, %v52
  %v58 = vsel %vm24, 0.0, %v54
  %v59 = vsel %vm27, %v57, 0.0
  %v60 = vsel %vm27, %v58, 0.0
  %v61 = vsel %vm30, %v60, 0.0
  %64 = vrot.lane.b32.xlu0 %v59, 126
  %v65 = vpop.permute.xlu0 %64
  %66 = vrot.lane.b32.xlu0 %v61, 126
  %v67 = vpop.permute.xlu0 %66
  %68 = vrot.lane.b32.xlu0 %v59, 124
  %v69 = vpop.permute.xlu0 %68
  %70 = vrot.lane.b32.xlu0 %v61, 124
  %v71 = vpop.permute.xlu0 %70
  %72 = vrot.lane.b32.xlu0 %v59, 16
  %v73 = vpop.permute.xlu0 %72
  %74 = vrot.lane.b32.xlu0 %v61, 16
  %v75 = vpop.permute.xlu0 %74
  %76 = vrot.lane.b32.xlu0 %v65, 16
  %v77 = vpop.permute.xlu0 %76
  %78 = vrot.lane.b32.xlu0 %v67, 16
  %v79 = vpop.permute.xlu0 %78
  %80 = vrot.lane.b32.xlu0 %v69, 16
  %v81 = vpop.permute.xlu0 %80
  %82 = vrot.lane.b32.xlu0 %v71, 16
  %v83 = vpop.permute.xlu0 %82
  %vm90 = vcmask 130048
  %v91 = vsel %vm90, %v28, %v73
  %v92 = vsel %vm90, %v31, %v75
  %v93 = vsel %vm90, %v35, %v77
  %v94 = vsel %vm90, %v37, %v79
  %v95 = vsel %vm90, %v41, %v81
  %v96 = vsel %vm90, %v43, %v83
  %v97 = vld [vmem:[%s1] sm:$0xff]
  %v98 = vld [vmem:[%s1 + $0x8] sm:$0xff]
  %v99 = vld [vmem:[%s1 + $0x10] sm:$0xff]
  %v100 = vld [vmem:[%s1 + $0x18] sm:$0xff]
  %v101 = vld [vmem:[%s2] sm:$0xff]
  %v102 = vld [vmem:[%s2 + $0x8] sm:$0xff]
  %v103 = vld [vmem:[%s2 + $0x10] sm:$0xff]
  %v104 = vld [vmem:[%s2 + $0x18] sm:$0xff]
  %106 = vset.pattern.permute.xlu0 0
  %107 = vperm.xlu0 %106, %v101
  %v108 = vpop.permute.xlu0 %107
  %111 = vset.pattern.permute.xlu0 0
  %112 = vperm.xlu0 %111, %v102
  %v113 = vpop.permute.xlu0 %112
  %116 = vset.pattern.permute.xlu0 0
  %117 = vperm.xlu0 %116, %v103
  %v118 = vpop.permute.xlu0 %117
  %121 = vset.pattern.permute.xlu0 0
  %122 = vperm.xlu0 %121, %v104
  %v123 = vpop.permute.xlu0 %122
  %vm125 = vcmask 392192
  %v127 = vsel %vm125, %v97, 0
  %v130 = vsel %vm125, %v98, 0
  %v133 = vsel %vm125, %v99, 0
  %v136 = vsel %vm125, %v100, 0
  %138 = vmatprep.subr.mxu0 0.0
  %139 = vmatpush1.msra.mxu0 %v91
  %140 = vmatprep.subr.mxu0 0.0
  %141 = vmatpush1.msra.mxu0 %v92
  %142 = vmatprep.subr.mxu0 0.0
  %143 = vmatpush1.msra.mxu0 %v93
  %144 = vmatprep.subr.mxu0 0.0
  %145 = vmatpush1.msra.mxu0 %v94
  %146 = vmatprep.subr.mxu0 0.0
  %147 = vmatpush1.msra.mxu0 %v95
  %148 = vmatprep.subr.mxu0 0.0
  %149 = vmatpush1.msra.mxu0 %v96
  %150 = vmatprep.subr.mxu0 0.0
  %151 = vmatpush1.msra.mxu0 0.0
  %152 = vmatprep.subr.mxu0 0.0
  %153 = vmatpush1.msra.mxu0 0.0
  %154 = vmatprep.subr.mxu0 0.0
  %155 = vmatpush1.msra.mxu0 0.0
  %156 = vmatprep.subr.mxu0 0.0
  %157 = vmatpush1.msra.mxu0 0.0
  %158 = vmatprep.subr.mxu0 0.0
  %159 = vmatpush1.msra.mxu0 0.0
  %160 = vmatprep.subr.mxu0 0.0
  %161 = vmatpush1.msra.mxu0 0.0
  %162 = vmatprep.subr.mxu0 0.0
  %163 = vmatpush1.msra.mxu0 0.0
  %164 = vmatprep.subr.mxu0 0.0
  %165 = vmatpush1.msra.mxu0 0.0
  %166 = vmatprep.subr.mxu0 0.0
  %167 = vmatpush1.msra.mxu0 0.0
  %168 = vmatprep.subr.mxu0 0.0
  %169 = vmatpush1.msra.mxu0 0.0
  %170 = vmatprep.subr.mxu0 0.0
  %171 = vmatpush1.msra.mxu0 0.0
  %172 = vmatprep.subr.mxu0 0.0
  %173 = vmatpush1.msra.mxu0 0.0
  %174 = vmatprep.subr.mxu0 0.0
  %175 = vmatpush1.msra.mxu0 0.0
  %176 = vmatprep.subr.mxu0 0.0
  %177 = vmatpush1.msra.mxu0 0.0
  %178 = vmatprep.subr.mxu0 0.0
  %179 = vmatpush1.msra.mxu0 0.0
  %180 = vmatprep.subr.mxu0 0.0
  %181 = vmatpush1.msra.mxu0 0.0
  %182 = vmatprep.subr.mxu0 0.0
  %183 = vmatpush1.msra.mxu0 0.0
  %184 = vmatprep.subr.mxu0 0.0
  %185 = vmatpush1.msra.mxu0 0.0
  %186 = vmatprep.subr.mxu0 0.0
  %187 = vmatpush1.msra.mxu0 0.0
  %188 = vmatprep.subr.mxu0 0.0
  %189 = vmatpush1.msra.mxu0 0.0
  %190 = vmatprep.subr.mxu0 0.0
  %191 = vmatpush1.msra.mxu0 0.0
  %192 = vmatprep.subr.mxu0 0.0
  %193 = vmatpush1.msra.mxu0 0.0
  %194 = vmatprep.subr.mxu0 0.0
  %195 = vmatpush1.msra.mxu0 0.0
  %196 = vmatprep.subr.mxu0 0.0
  %197 = vmatpush1.msra.mxu0 0.0
  %198 = vmatprep.subr.mxu0 0.0
  %199 = vmatpush1.msra.mxu0 0.0
  %200 = vmatprep.subr.mxu0 0.0
  %201 = vmatpush1.msra.mxu0 0.0
  %202 = vmatprep.mubr.f32.mxu0 0.0
  %203 = vmatmul.mubr.f32.gmra.mrb[0].mxu0 %v127
  %v204 = vpop.f32.mrb[0].mxu0
  %v205 = vadd.f32 %v108, %v204
  %v206 = vpop.f32.mrb[0].mxu0
  %207 = vmatprep.mubr.f32.mxu0 0.0
  %208 = vmatmul.mubr.f32.gmra.mrb[0].mxu0 %v130
  %v209 = vpop.f32.mrb[0].mxu0
  %v210 = vadd.f32 %v113, %v209
  %v211 = vpop.f32.mrb[0].mxu0
  %212 = vmatprep.mubr.f32.mxu0 0.0
  %213 = vmatmul.mubr.f32.gmra.mrb[0].mxu0 %v133
  %v214 = vpop.f32.mrb[0].mxu0
  %v215 = vadd.f32 %v118, %v214
  %v216 = vpop.f32.mrb[0].mxu0
  %217 = vmatprep.mubr.f32.mxu0 0.0
  %218 = vmatmul.mubr.f32.gmra.mrb[0].mxu0 %v136
  %v219 = vpop.f32.mrb[0].mxu0
  %v220 = vadd.f32 %v123, %v219
  %v221 = vpop.f32.mrb[0].mxu0
  %222 = vdwg.mxu0
  %v223 = vmax.f32 %v205, 0.0
  %v224 = vmax.f32 %v210, 0.0
  %v225 = vmax.f32 %v215, 0.0
  %v226 = vmax.f32 %v220, 0.0
  %227 = vst.msk [vmem:[%s3] sm:$0xff] %vm90, %v223
  %228 = vst.msk [vmem:[%s3 + $0x8] sm:$0xff] %vm90, %v224
  %229 = vst.msk [vmem:[%s3 + $0x10] sm:$0xff] %vm90, %v225
  %230 = vst.msk [vmem:[%s3 + $0x18] sm:$0xff] %vm90, %v226
  %235 = vrot.lane.b32.xlu0 %v223, 112
  %v236 = vpop.permute.xlu0 %235
  %237 = vrot.lane.b32.xlu0 %v224, 112
  %v238 = vpop.permute.xlu0 %237
  %239 = vrot.lane.b32.xlu0 %v225, 112
  %v240 = vpop.permute.xlu0 %239
  %241 = vrot.lane.b32.xlu0 %v226, 112
  %v242 = vpop.permute.xlu0 %241
  %s247 = scalar_lea.vmem %s3, 32
  %248 = vst.msk [vmem:[%s247] sm:$0xff] %vm90, %v236
  %249 = vst.msk [vmem:[%s247 + $0x8] sm:$0xff] %vm90, %v238
  %250 = vst.msk [vmem:[%s247 + $0x10] sm:$0xff] %vm90, %v240
  %251 = vst.msk [vmem:[%s247 + $0x18] sm:$0xff] %vm90, %v242
  // Predicated region
  $region14: #{tpu_custom_call.1} parent=0 // pred_check
    _
  $region15: #{tpu_custom_call.1} parent=0 // pred_check_branch
    %253 = sbr.rel (0) target = $region17
  $region16: #{tpu_custom_call.1} parent=0 // pred_region
    _
  $region17: #{tpu_custom_call.1} parent=0 // pred_fallthru
    _
  // Predicated region
  $region18: #{tpu_custom_call.1} parent=0 // pred_check
    _
  $region19: #{tpu_custom_call.1} parent=0 // pred_check_branch
    %255 = sbr.rel (0) target = $region21
  $region20: #{tpu_custom_call.1} parent=0 // pred_region
    _
  $region21: #{tpu_custom_call.1} parent=0 // pred_fallthru
    _

</llo_original>
